<compile_context>
chip_gen: v7x
topology: tpu7x:2x2x1
jax: 0.10.0
libtpu: 0.0.40
codegen_flags: <defaults>
</compile_context>

<pallas_src>
import jax
import jax.numpy as jnp
import numpy as np
from jax.experimental import pallas as pl
from jax.experimental.pallas import tpu as pltpu

_TAPS = [(dh, dw) for dh in (-1, 0, 1) for dw in (-1, 0, 1)]  # kh = dh+1, kw = dw+1


def _make_skip_conv_kernel(H, W, Cin, Cout):
    HW = H * W

    def kernel(x_ref, w_ref, b_ref, m_ref, out_ref):
        # x_ref:   (1, Cin, HW)       flattened NCHW input block (VMEM)
        # w_ref:   (Cout, Cin*9)      conv weights, col = ci*9 + kh*3 + kw (VMEM)
        # b_ref:   (Cout, 1)          conv bias column (VMEM)
        # m_ref:   (9, HW)            multiplicative border masks per tap (VMEM)
        # out_ref: (1, Cin+Cout, HW)  [skip | conv], spatial flattened

        # ---- skip branch: straight lane-dense copy of the input rows ----
        out_ref[0, 0:Cin, :] = x_ref[0].astype(out_ref.dtype)

        x = x_ref[0].astype(jnp.float32)          # (Cin, HW)
        w_all = w_ref[...].astype(jnp.float32)    # (Cout, Cin*9)

        # ---- conv branch: 9 rolled/masked taps accumulated on the VPU,
        #      directly in the output channel layout (Cout, HW) ----
        acc = jnp.zeros((Cout, HW), dtype=jnp.float32)
        for tap, (dh, dw) in enumerate(_TAPS):
            shift = dh * W + dw                   # flattened read offset
            if shift == 0:
                x_tap = x
            else:
                # x_tap[p] = x[p + shift] (circular); the wrapped-around part
                # is exactly the zero-padding region -> zeroed by the mask.
                x_tap = pltpu.roll(x, shift=(-shift) % HW, axis=1)
            if (dh, dw) != (0, 0):
                x_tap = x_tap * m_ref[tap:tap + 1, :]          # (Cin, HW)
            for ci in range(Cin):
                j = ci * 9 + tap
                w_col = w_all[:, j:j + 1]                      # (Cout, 1)
                acc = acc + w_col * x_tap[ci:ci + 1, :]        # (Cout, HW)

        conv = acc + b_ref[...].astype(jnp.float32)            # (Cout, HW)
        out_ref[0, Cin:Cin + Cout, :] = conv.astype(out_ref.dtype)

    return kernel


def _border_masks(H, W):
    """Shape-only multiplicative masks (9, H*W): mask[tap, p] = 1 iff the
    pixel read by conv tap (dh, dw) at flattened position p is in-bounds."""
    h_idx = np.repeat(np.arange(H), W)
    w_idx = np.tile(np.arange(W), H)
    masks = np.ones((9, H * W), np.float32)
    for tap, (dh, dw) in enumerate(_TAPS):
        valid = np.ones(H * W, bool)
        if dh == -1:
            valid &= h_idx >= 1
        elif dh == 1:
            valid &= h_idx <= H - 2
        if dw == -1:
            valid &= w_idx >= 1
        elif dw == 1:
            valid &= w_idx <= W - 2
        masks[tap] = valid.astype(np.float32)
    return masks


def skip_connection_forward(x_nchw, w_oihw, bias):
    """x_nchw: (N, Cin, H, W) -> (N, Cin+Cout, H, W), matching
    torch.cat((X, Conv2d(X)), dim=1) with 3x3 / padding=1 weights (OIHW)."""
    N, Cin, H, W = x_nchw.shape
    Cout = w_oihw.shape[0]
    HW = H * W

    # Free reshapes: (N, C, H, W) <-> (N, C, H*W) are the same contiguous bytes.
    x_flat = x_nchw.reshape(N, Cin, HW)
    w2d = w_oihw.reshape(Cout, Cin * 9)          # column index = ci*9 + kh*3 + kw
    b2d = bias.reshape(Cout, 1)
    masks = jnp.asarray(_border_masks(H, W))

    kernel = _make_skip_conv_kernel(H, W, Cin, Cout)

    # VMEM budget from actual block sizes (double-buffered I/O + parameters)
    # with generous headroom; capped well below v7x's 64 MiB physical VMEM.
    esize = x_nchw.dtype.itemsize
    step_bytes = (Cin * HW * esize + (Cin + Cout) * HW * esize
                  + w2d.size * esize + b2d.size * esize + masks.size * 4)
    vmem_limit = int(min(64 << 20, max(8 << 20, 4 * step_bytes)))

    out_flat = pl.pallas_call(
        kernel,
        out_shape=jax.ShapeDtypeStruct((N, Cin + Cout, HW), x_nchw.dtype),
        grid_spec=pltpu.PrefetchScalarGridSpec(
            num_scalar_prefetch=0,
            grid=(N,),
            in_specs=[
                # One image per grid step; every block's last two dims equal
                # the full array extents, so the (8,128) rule is satisfied.
                pl.BlockSpec((1, Cin, HW), lambda n: (n, 0, 0)),
                pl.BlockSpec((Cout, Cin * 9), lambda n: (0, 0)),
                pl.BlockSpec((Cout, 1), lambda n: (0, 0)),
                pl.BlockSpec((9, HW), lambda n: (0, 0)),
            ],
            out_specs=pl.BlockSpec((1, Cin + Cout, HW), lambda n: (n, 0, 0)),
        ),
        compiler_params=pltpu.CompilerParams(
            dimension_semantics=("parallel",),
            vmem_limit_bytes=vmem_limit,
        ),
    )(x_flat, w2d, b2d, masks)

    # Free reshape back to NCHW: same contiguous bytes.
    return out_flat.reshape(N, Cin + Cout, H, W)


def _reference(x_nchw, w_oihw, bias):
    """Pure-JAX reference: conv2d(pad=1, OIHW) then channel concat (NCHW)."""
    y = jax.lax.conv_general_dilated(
        x_nchw, w_oihw, window_strides=(1, 1), padding="SAME",
        dimension_numbers=("NCHW", "OIHW", "NCHW"))
    y = y + bias.reshape(1, -1, 1, 1)
    return jnp.concatenate([x_nchw, y], axis=1)


if __name__ == "__main__":
    key = jax.random.PRNGKey(0)
    kx, kw, kb = jax.random.split(key, 3)

    N, Cin, H, W = 2, 4, 16, 16
    Cout = 4

    x = jax.random.normal(kx, (N, Cin, H, W), dtype=jnp.float32)
    # deterministic "Conv2d(Cin, Cout, 3, padding=1)" parameters (OIHW, as torch)
    w = jax.random.normal(kw, (Cout, Cin, 3, 3), dtype=jnp.float32) * 0.1
    b = jax.random.normal(kb, (Cout,), dtype=jnp.float32) * 0.1

    out = jax.block_until_ready(skip_connection_forward(x, w, b))
    ref = _reference(x, w, b)

    assert out.shape == (N, Cin + Cout, H, W)
    assert jnp.allclose(out, ref, atol=1e-4, rtol=1e-4)

    print("KERNEL_OK")
</pallas_src>

<mosaic_0001>
module attributes {stable_mosaic.version = 11 : i64} {
  func.func @kernel(%arg0: i32, %arg1: memref<1x4x256xf32, #tpu.memory_space<vmem>>, %arg2: memref<4x36xf32, #tpu.memory_space<vmem>>, %arg3: memref<4x1xf32, #tpu.memory_space<vmem>>, %arg4: memref<9x256xf32, #tpu.memory_space<vmem>>, %arg5: memref<1x8x256xf32, #tpu.memory_space<vmem>>) attributes {dimension_semantics = [#tpu.dimension_semantics<parallel>], iteration_bounds = array<i64: 2>, scalar_prefetch = 0 : i64, scratch_operands = 0 : i64, tpu.core_type = #tpu.core_type<tc>, window_params = [{transform_indices = @transform_0, window_bounds = array<i64: 1, 4, 256>}, {pipeline_mode = #tpu.pipeline_mode<synchronous>, transform_indices = @transform_1, window_bounds = array<i64: 4, 36>}, {pipeline_mode = #tpu.pipeline_mode<synchronous>, transform_indices = @transform_2, window_bounds = array<i64: 4, 1>}, {pipeline_mode = #tpu.pipeline_mode<synchronous>, transform_indices = @transform_3, window_bounds = array<i64: 9, 256>}, {transform_indices = @transform_4, window_bounds = array<i64: 1, 8, 256>}]} {
    %c0 = arith.constant 0 : index
    %c0_0 = arith.constant 0 : index
    %c0_1 = arith.constant 0 : index
    %0 = vector.load %arg1[%c0, %c0_0, %c0_1] : memref<1x4x256xf32, #tpu.memory_space<vmem>>, vector<1x4x256xf32>
    %1 = vector.shape_cast %0 : vector<1x4x256xf32> to vector<4x256xf32>
    %c0_2 = arith.constant 0 : index
    %c0_3 = arith.constant 0 : index
    %c0_4 = arith.constant 0 : index
    %2 = vector.load %arg5[%c0_2, %c0_3, %c0_4] : memref<1x8x256xf32, #tpu.memory_space<vmem>>, vector<1x4x256xf32>
    %3 = vector.shape_cast %2 : vector<1x4x256xf32> to vector<4x256xf32>
    %4 = vector.shape_cast %1 : vector<4x256xf32> to vector<1x4x256xf32>
    tpu.vector_store %arg5[%c0_2, %c0_3, %c0_4], %4 {strides = array<i32>} : memref<1x8x256xf32, #tpu.memory_space<vmem>>, vector<1x4x256xf32>,
    %c0_5 = arith.constant 0 : index
    %c0_6 = arith.constant 0 : index
    %c0_7 = arith.constant 0 : index
    %5 = vector.load %arg1[%c0_5, %c0_6, %c0_7] : memref<1x4x256xf32, #tpu.memory_space<vmem>>, vector<1x4x256xf32>
    %6 = vector.shape_cast %5 : vector<1x4x256xf32> to vector<4x256xf32>
    %c0_8 = arith.constant 0 : index
    %c0_9 = arith.constant 0 : index
    %7 = vector.load %arg2[%c0_8, %c0_9] : memref<4x36xf32, #tpu.memory_space<vmem>>, vector<4x36xf32>
    %cst = arith.constant 0.000000e+00 : f32
    %8 = vector.broadcast %cst : f32 to vector<4x256xf32>
    %c17_i32 = arith.constant 17 : i32
    %9 = tpu.dynamic_rotate %6 by %c17_i32 dim 1 : vector<4x256xf32>, i32 -> vector<4x256xf32>
    %c0_10 = arith.constant 0 : index
    %c0_11 = arith.constant 0 : index
    %10 = vector.load %arg4[%c0_10, %c0_11] : memref<9x256xf32, #tpu.memory_space<vmem>>, vector<1x256xf32>
    %11 = vector.broadcast %10 : vector<1x256xf32> to vector<4x256xf32>
    %12 = arith.mulf %9, %11 : vector<4x256xf32>
    %13 = vector.extract_strided_slice %7 {offsets = [0, 0], sizes = [4, 1], strides = [1, 1]} : vector<4x36xf32> to vector<4x1xf32>
    %14 = vector.extract_strided_slice %12 {offsets = [0, 0], sizes = [1, 256], strides = [1, 1]} : vector<4x256xf32> to vector<1x256xf32>
    %15 = vector.broadcast %13 : vector<4x1xf32> to vector<4x256xf32>
    %16 = vector.broadcast %14 : vector<1x256xf32> to vector<4x256xf32>
    %17 = arith.mulf %15, %16 : vector<4x256xf32>
    %18 = arith.addf %8, %17 : vector<4x256xf32>
    %19 = vector.extract_strided_slice %7 {offsets = [0, 9], sizes = [4, 1], strides = [1, 1]} : vector<4x36xf32> to vector<4x1xf32>
    %20 = vector.extract_strided_slice %12 {offsets = [1, 0], sizes = [1, 256], strides = [1, 1]} : vector<4x256xf32> to vector<1x256xf32>
    %21 = vector.broadcast %19 : vector<4x1xf32> to vector<4x256xf32>
    %22 = vector.broadcast %20 : vector<1x256xf32> to vector<4x256xf32>
    %23 = arith.mulf %21, %22 : vector<4x256xf32>
    %24 = arith.addf %18, %23 : vector<4x256xf32>
    %25 = vector.extract_strided_slice %7 {offsets = [0, 18], sizes = [4, 1], strides = [1, 1]} : vector<4x36xf32> to vector<4x1xf32>
    %26 = vector.extract_strided_slice %12 {offsets = [2, 0], sizes = [1, 256], strides = [1, 1]} : vector<4x256xf32> to vector<1x256xf32>
    %27 = vector.broadcast %25 : vector<4x1xf32> to vector<4x256xf32>
    %28 = vector.broadcast %26 : vector<1x256xf32> to vector<4x256xf32>
    %29 = arith.mulf %27, %28 : vector<4x256xf32>
    %30 = arith.addf %24, %29 : vector<4x256xf32>
    %31 = vector.extract_strided_slice %7 {offsets = [0, 27], sizes = [4, 1], strides = [1, 1]} : vector<4x36xf32> to vector<4x1xf32>
    %32 = vector.extract_strided_slice %12 {offsets = [3, 0], sizes = [1, 256], strides = [1, 1]} : vector<4x256xf32> to vector<1x256xf32>
    %33 = vector.broadcast %31 : vector<4x1xf32> to vector<4x256xf32>
    %34 = vector.broadcast %32 : vector<1x256xf32> to vector<4x256xf32>
    %35 = arith.mulf %33, %34 : vector<4x256xf32>
    %36 = arith.addf %30, %35 : vector<4x256xf32>
    %c16_i32 = arith.constant 16 : i32
    %37 = tpu.dynamic_rotate %6 by %c16_i32 dim 1 : vector<4x256xf32>, i32 -> vector<4x256xf32>
    %c1 = arith.constant 1 : index
    %c0_12 = arith.constant 0 : index
    %38 = vector.load %arg4[%c1, %c0_12] : memref<9x256xf32, #tpu.memory_space<vmem>>, vector<1x256xf32>
    %39 = vector.broadcast %38 : vector<1x256xf32> to vector<4x256xf32>
    %40 = arith.mulf %37, %39 : vector<4x256xf32>
    %41 = vector.extract_strided_slice %7 {offsets = [0, 1], sizes = [4, 1], strides = [1, 1]} : vector<4x36xf32> to vector<4x1xf32>
    %42 = vector.extract_strided_slice %40 {offsets = [0, 0], sizes = [1, 256], strides = [1, 1]} : vector<4x256xf32> to vector<1x256xf32>
    %43 = vector.broadcast %41 : vector<4x1xf32> to vector<4x256xf32>
    %44 = vector.broadcast %42 : vector<1x256xf32> to vector<4x256xf32>
    %45 = arith.mulf %43, %44 : vector<4x256xf32>
    %46 = arith.addf %36, %45 : vector<4x256xf32>
    %47 = vector.extract_strided_slice %7 {offsets = [0, 10], sizes = [4, 1], strides = [1, 1]} : vector<4x36xf32> to vector<4x1xf32>
    %48 = vector.extract_strided_slice %40 {offsets = [1, 0], sizes = [1, 256], strides = [1, 1]} : vector<4x256xf32> to vector<1x256xf32>
    %49 = vector.broadcast %47 : vector<4x1xf32> to vector<4x256xf32>
    %50 = vector.broadcast %48 : vector<1x256xf32> to vector<4x256xf32>
    %51 = arith.mulf %49, %50 : vector<4x256xf32>
    %52 = arith.addf %46, %51 : vector<4x256xf32>
    %53 = vector.extract_strided_slice %7 {offsets = [0, 19], sizes = [4, 1], strides = [1, 1]} : vector<4x36xf32> to vector<4x1xf32>
    %54 = vector.extract_strided_slice %40 {offsets = [2, 0], sizes = [1, 256], strides = [1, 1]} : vector<4x256xf32> to vector<1x256xf32>
    %55 = vector.broadcast %53 : vector<4x1xf32> to vector<4x256xf32>
    %56 = vector.broadcast %54 : vector<1x256xf32> to vector<4x256xf32>
    %57 = arith.mulf %55, %56 : vector<4x256xf32>
    %58 = arith.addf %52, %57 : vector<4x256xf32>
    %59 = vector.extract_strided_slice %7 {offsets = [0, 28], sizes = [4, 1], strides = [1, 1]} : vector<4x36xf32> to vector<4x1xf32>
    %60 = vector.extract_strided_slice %40 {offsets = [3, 0], sizes = [1, 256], strides = [1, 1]} : vector<4x256xf32> to vector<1x256xf32>
    %61 = vector.broadcast %59 : vector<4x1xf32> to vector<4x256xf32>
    %62 = vector.broadcast %60 : vector<1x256xf32> to vector<4x256xf32>
    %63 = arith.mulf %61, %62 : vector<4x256xf32>
    %64 = arith.addf %58, %63 : vector<4x256xf32>
    %c15_i32 = arith.constant 15 : i32
    %65 = tpu.dynamic_rotate %6 by %c15_i32 dim 1 : vector<4x256xf32>, i32 -> vector<4x256xf32>
    %c2 = arith.constant 2 : index
    %c0_13 = arith.constant 0 : index
    %66 = vector.load %arg4[%c2, %c0_13] : memref<9x256xf32, #tpu.memory_space<vmem>>, vector<1x256xf32>
    %67 = vector.broadcast %66 : vector<1x256xf32> to vector<4x256xf32>
    %68 = arith.mulf %65, %67 : vector<4x256xf32>
    %69 = vector.extract_strided_slice %7 {offsets = [0, 2], sizes = [4, 1], strides = [1, 1]} : vector<4x36xf32> to vector<4x1xf32>
    %70 = vector.extract_strided_slice %68 {offsets = [0, 0], sizes = [1, 256], strides = [1, 1]} : vector<4x256xf32> to vector<1x256xf32>
    %71 = vector.broadcast %69 : vector<4x1xf32> to vector<4x256xf32>
    %72 = vector.broadcast %70 : vector<1x256xf32> to vector<4x256xf32>
    %73 = arith.mulf %71, %72 : vector<4x256xf32>
    %74 = arith.addf %64, %73 : vector<4x256xf32>
    %75 = vector.extract_strided_slice %7 {offsets = [0, 11], sizes = [4, 1], strides = [1, 1]} : vector<4x36xf32> to vector<4x1xf32>
    %76 = vector.extract_strided_slice %68 {offsets = [1, 0], sizes = [1, 256], strides = [1, 1]} : vector<4x256xf32> to vector<1x256xf32>
    %77 = vector.broadcast %75 : vector<4x1xf32> to vector<4x256xf32>
    %78 = vector.broadcast %76 : vector<1x256xf32> to vector<4x256xf32>
    %79 = arith.mulf %77, %78 : vector<4x256xf32>
    %80 = arith.addf %74, %79 : vector<4x256xf32>
    %81 = vector.extract_strided_slice %7 {offsets = [0, 20], sizes = [4, 1], strides = [1, 1]} : vector<4x36xf32> to vector<4x1xf32>
    %82 = vector.extract_strided_slice %68 {offsets = [2, 0], sizes = [1, 256], strides = [1, 1]} : vector<4x256xf32> to vector<1x256xf32>
    %83 = vector.broadcast %81 : vector<4x1xf32> to vector<4x256xf32>
    %84 = vector.broadcast %82 : vector<1x256xf32> to vector<4x256xf32>
    %85 = arith.mulf %83, %84 : vector<4x256xf32>
    %86 = arith.addf %80, %85 : vector<4x256xf32>
    %87 = vector.extract_strided_slice %7 {offsets = [0, 29], sizes = [4, 1], strides = [1, 1]} : vector<4x36xf32> to vector<4x1xf32>
    %88 = vector.extract_strided_slice %68 {offsets = [3, 0], sizes = [1, 256], strides = [1, 1]} : vector<4x256xf32> to vector<1x256xf32>
    %89 = vector.broadcast %87 : vector<4x1xf32> to vector<4x256xf32>
    %90 = vector.broadcast %88 : vector<1x256xf32> to vector<4x256xf32>
    %91 = arith.mulf %89, %90 : vector<4x256xf32>
    %92 = arith.addf %86, %91 : vector<4x256xf32>
    %c1_i32 = arith.constant 1 : i32
    %93 = tpu.dynamic_rotate %6 by %c1_i32 dim 1 : vector<4x256xf32>, i32 -> vector<4x256xf32>
    %c3 = arith.constant 3 : index
    %c0_14 = arith.constant 0 : index
    %94 = vector.load %arg4[%c3, %c0_14] : memref<9x256xf32, #tpu.memory_space<vmem>>, vector<1x256xf32>
    %95 = vector.broadcast %94 : vector<1x256xf32> to vector<4x256xf32>
    %96 = arith.mulf %93, %95 : vector<4x256xf32>
    %97 = vector.extract_strided_slice %7 {offsets = [0, 3], sizes = [4, 1], strides = [1, 1]} : vector<4x36xf32> to vector<4x1xf32>
    %98 = vector.extract_strided_slice %96 {offsets = [0, 0], sizes = [1, 256], strides = [1, 1]} : vector<4x256xf32> to vector<1x256xf32>
    %99 = vector.broadcast %97 : vector<4x1xf32> to vector<4x256xf32>
    %100 = vector.broadcast %98 : vector<1x256xf32> to vector<4x256xf32>
    %101 = arith.mulf %99, %100 : vector<4x256xf32>
    %102 = arith.addf %92, %101 : vector<4x256xf32>
    %103 = vector.extract_strided_slice %7 {offsets = [0, 12], sizes = [4, 1], strides = [1, 1]} : vector<4x36xf32> to vector<4x1xf32>
    %104 = vector.extract_strided_slice %96 {offsets = [1, 0], sizes = [1, 256], strides = [1, 1]} : vector<4x256xf32> to vector<1x256xf32>
    %105 = vector.broadcast %103 : vector<4x1xf32> to vector<4x256xf32>
    %106 = vector.broadcast %104 : vector<1x256xf32> to vector<4x256xf32>
    %107 = arith.mulf %105, %106 : vector<4x256xf32>
    %108 = arith.addf %102, %107 : vector<4x256xf32>
    %109 = vector.extract_strided_slice %7 {offsets = [0, 21], sizes = [4, 1], strides = [1, 1]} : vector<4x36xf32> to vector<4x1xf32>
    %110 = vector.extract_strided_slice %96 {offsets = [2, 0], sizes = [1, 256], strides = [1, 1]} : vector<4x256xf32> to vector<1x256xf32>
    %111 = vector.broadcast %109 : vector<4x1xf32> to vector<4x256xf32>
    %112 = vector.broadcast %110 : vector<1x256xf32> to vector<4x256xf32>
    %113 = arith.mulf %111, %112 : vector<4x256xf32>
    %114 = arith.addf %108, %113 : vector<4x256xf32>
    %115 = vector.extract_strided_slice %7 {offsets = [0, 30], sizes = [4, 1], strides = [1, 1]} : vector<4x36xf32> to vector<4x1xf32>
    %116 = vector.extract_strided_slice %96 {offsets = [3, 0], sizes = [1, 256], strides = [1, 1]} : vector<4x256xf32> to vector<1x256xf32>
    %117 = vector.broadcast %115 : vector<4x1xf32> to vector<4x256xf32>
    %118 = vector.broadcast %116 : vector<1x256xf32> to vector<4x256xf32>
    %119 = arith.mulf %117, %118 : vector<4x256xf32>
    %120 = arith.addf %114, %119 : vector<4x256xf32>
    %121 = vector.extract_strided_slice %7 {offsets = [0, 4], sizes = [4, 1], strides = [1, 1]} : vector<4x36xf32> to vector<4x1xf32>
    %122 = vector.extract_strided_slice %6 {offsets = [0, 0], sizes = [1, 256], strides = [1, 1]} : vector<4x256xf32> to vector<1x256xf32>
    %123 = vector.broadcast %121 : vector<4x1xf32> to vector<4x256xf32>
    %124 = vector.broadcast %122 : vector<1x256xf32> to vector<4x256xf32>
    %125 = arith.mulf %123, %124 : vector<4x256xf32>
    %126 = arith.addf %120, %125 : vector<4x256xf32>
    %127 = vector.extract_strided_slice %7 {offsets = [0, 13], sizes = [4, 1], strides = [1, 1]} : vector<4x36xf32> to vector<4x1xf32>
    %128 = vector.extract_strided_slice %6 {offsets = [1, 0], sizes = [1, 256], strides = [1, 1]} : vector<4x256xf32> to vector<1x256xf32>
    %129 = vector.broadcast %127 : vector<4x1xf32> to vector<4x256xf32>
    %130 = vector.broadcast %128 : vector<1x256xf32> to vector<4x256xf32>
    %131 = arith.mulf %129, %130 : vector<4x256xf32>
    %132 = arith.addf %126, %131 : vector<4x256xf32>
    %133 = vector.extract_strided_slice %7 {offsets = [0, 22], sizes = [4, 1], strides = [1, 1]} : vector<4x36xf32> to vector<4x1xf32>
    %134 = vector.extract_strided_slice %6 {offsets = [2, 0], sizes = [1, 256], strides = [1, 1]} : vector<4x256xf32> to vector<1x256xf32>
    %135 = vector.broadcast %133 : vector<4x1xf32> to vector<4x256xf32>
    %136 = vector.broadcast %134 : vector<1x256xf32> to vector<4x256xf32>
    %137 = arith.mulf %135, %136 : vector<4x256xf32>
    %138 = arith.addf %132, %137 : vector<4x256xf32>
    %139 = vector.extract_strided_slice %7 {offsets = [0, 31], sizes = [4, 1], strides = [1, 1]} : vector<4x36xf32> to vector<4x1xf32>
    %140 = vector.extract_strided_slice %6 {offsets = [3, 0], sizes = [1, 256], strides = [1, 1]} : vector<4x256xf32> to vector<1x256xf32>
    %141 = vector.broadcast %139 : vector<4x1xf32> to vector<4x256xf32>
    %142 = vector.broadcast %140 : vector<1x256xf32> to vector<4x256xf32>
    %143 = arith.mulf %141, %142 : vector<4x256xf32>
    %144 = arith.addf %138, %143 : vector<4x256xf32>
    %c255_i32 = arith.constant 255 : i32
    %145 = tpu.dynamic_rotate %6 by %c255_i32 dim 1 : vector<4x256xf32>, i32 -> vector<4x256xf32>
    %c5 = arith.constant 5 : index
    %c0_15 = arith.constant 0 : index
    %146 = vector.load %arg4[%c5, %c0_15] : memref<9x256xf32, #tpu.memory_space<vmem>>, vector<1x256xf32>
    %147 = vector.broadcast %146 : vector<1x256xf32> to vector<4x256xf32>
    %148 = arith.mulf %145, %147 : vector<4x256xf32>
    %149 = vector.extract_strided_slice %7 {offsets = [0, 5], sizes = [4, 1], strides = [1, 1]} : vector<4x36xf32> to vector<4x1xf32>
    %150 = vector.extract_strided_slice %148 {offsets = [0, 0], sizes = [1, 256], strides = [1, 1]} : vector<4x256xf32> to vector<1x256xf32>
    %151 = vector.broadcast %149 : vector<4x1xf32> to vector<4x256xf32>
    %152 = vector.broadcast %150 : vector<1x256xf32> to vector<4x256xf32>
    %153 = arith.mulf %151, %152 : vector<4x256xf32>
    %154 = arith.addf %144, %153 : vector<4x256xf32>
    %155 = vector.extract_strided_slice %7 {offsets = [0, 14], sizes = [4, 1], strides = [1, 1]} : vector<4x36xf32> to vector<4x1xf32>
    %156 = vector.extract_strided_slice %148 {offsets = [1, 0], sizes = [1, 256], strides = [1, 1]} : vector<4x256xf32> to vector<1x256xf32>
    %157 = vector.broadcast %155 : vector<4x1xf32> to vector<4x256xf32>
    %158 = vector.broadcast %156 : vector<1x256xf32> to vector<4x256xf32>
    %159 = arith.mulf %157, %158 : vector<4x256xf32>
    %160 = arith.addf %154, %159 : vector<4x256xf32>
    %161 = vector.extract_strided_slice %7 {offsets = [0, 23], sizes = [4, 1], strides = [1, 1]} : vector<4x36xf32> to vector<4x1xf32>
    %162 = vector.extract_strided_slice %148 {offsets = [2, 0], sizes = [1, 256], strides = [1, 1]} : vector<4x256xf32> to vector<1x256xf32>
    %163 = vector.broadcast %161 : vector<4x1xf32> to vector<4x256xf32>
    %164 = vector.broadcast %162 : vector<1x256xf32> to vector<4x256xf32>
    %165 = arith.mulf %163, %164 : vector<4x256xf32>
    %166 = arith.addf %160, %165 : vector<4x256xf32>
    %167 = vector.extract_strided_slice %7 {offsets = [0, 32], sizes = [4, 1], strides = [1, 1]} : vector<4x36xf32> to vector<4x1xf32>
    %168 = vector.extract_strided_slice %148 {offsets = [3, 0], sizes = [1, 256], strides = [1, 1]} : vector<4x256xf32> to vector<1x256xf32>
    %169 = vector.broadcast %167 : vector<4x1xf32> to vector<4x256xf32>
    %170 = vector.broadcast %168 : vector<1x256xf32> to vector<4x256xf32>
    %171 = arith.mulf %169, %170 : vector<4x256xf32>
    %172 = arith.addf %166, %171 : vector<4x256xf32>
    %c241_i32 = arith.constant 241 : i32
    %173 = tpu.dynamic_rotate %6 by %c241_i32 dim 1 : vector<4x256xf32>, i32 -> vector<4x256xf32>
    %c6 = arith.constant 6 : index
    %c0_16 = arith.constant 0 : index
    %174 = vector.load %arg4[%c6, %c0_16] : memref<9x256xf32, #tpu.memory_space<vmem>>, vector<1x256xf32>
    %175 = vector.broadcast %174 : vector<1x256xf32> to vector<4x256xf32>
    %176 = arith.mulf %173, %175 : vector<4x256xf32>
    %177 = vector.extract_strided_slice %7 {offsets = [0, 6], sizes = [4, 1], strides = [1, 1]} : vector<4x36xf32> to vector<4x1xf32>
    %178 = vector.extract_strided_slice %176 {offsets = [0, 0], sizes = [1, 256], strides = [1, 1]} : vector<4x256xf32> to vector<1x256xf32>
    %179 = vector.broadcast %177 : vector<4x1xf32> to vector<4x256xf32>
    %180 = vector.broadcast %178 : vector<1x256xf32> to vector<4x256xf32>
    %181 = arith.mulf %179, %180 : vector<4x256xf32>
    %182 = arith.addf %172, %181 : vector<4x256xf32>
    %183 = vector.extract_strided_slice %7 {offsets = [0, 15], sizes = [4, 1], strides = [1, 1]} : vector<4x36xf32> to vector<4x1xf32>
    %184 = vector.extract_strided_slice %176 {offsets = [1, 0], sizes = [1, 256], strides = [1, 1]} : vector<4x256xf32> to vector<1x256xf32>
    %185 = vector.broadcast %183 : vector<4x1xf32> to vector<4x256xf32>
    %186 = vector.broadcast %184 : vector<1x256xf32> to vector<4x256xf32>
    %187 = arith.mulf %185, %186 : vector<4x256xf32>
    %188 = arith.addf %182, %187 : vector<4x256xf32>
    %189 = vector.extract_strided_slice %7 {offsets = [0, 24], sizes = [4, 1], strides = [1, 1]} : vector<4x36xf32> to vector<4x1xf32>
    %190 = vector.extract_strided_slice %176 {offsets = [2, 0], sizes = [1, 256], strides = [1, 1]} : vector<4x256xf32> to vector<1x256xf32>
    %191 = vector.broadcast %189 : vector<4x1xf32> to vector<4x256xf32>
    %192 = vector.broadcast %190 : vector<1x256xf32> to vector<4x256xf32>
    %193 = arith.mulf %191, %192 : vector<4x256xf32>
    %194 = arith.addf %188, %193 : vector<4x256xf32>
    %195 = vector.extract_strided_slice %7 {offsets = [0, 33], sizes = [4, 1], strides = [1, 1]} : vector<4x36xf32> to vector<4x1xf32>
    %196 = vector.extract_strided_slice %176 {offsets = [3, 0], sizes = [1, 256], strides = [1, 1]} : vector<4x256xf32> to vector<1x256xf32>
    %197 = vector.broadcast %195 : vector<4x1xf32> to vector<4x256xf32>
    %198 = vector.broadcast %196 : vector<1x256xf32> to vector<4x256xf32>
    %199 = arith.mulf %197, %198 : vector<4x256xf32>
    %200 = arith.addf %194, %199 : vector<4x256xf32>
    %c240_i32 = arith.constant 240 : i32
    %201 = tpu.dynamic_rotate %6 by %c240_i32 dim 1 : vector<4x256xf32>, i32 -> vector<4x256xf32>
    %c7 = arith.constant 7 : index
    %c0_17 = arith.constant 0 : index
    %202 = vector.load %arg4[%c7, %c0_17] : memref<9x256xf32, #tpu.memory_space<vmem>>, vector<1x256xf32>
    %203 = vector.broadcast %202 : vector<1x256xf32> to vector<4x256xf32>
    %204 = arith.mulf %201, %203 : vector<4x256xf32>
    %205 = vector.extract_strided_slice %7 {offsets = [0, 7], sizes = [4, 1], strides = [1, 1]} : vector<4x36xf32> to vector<4x1xf32>
    %206 = vector.extract_strided_slice %204 {offsets = [0, 0], sizes = [1, 256], strides = [1, 1]} : vector<4x256xf32> to vector<1x256xf32>
    %207 = vector.broadcast %205 : vector<4x1xf32> to vector<4x256xf32>
    %208 = vector.broadcast %206 : vector<1x256xf32> to vector<4x256xf32>
    %209 = arith.mulf %207, %208 : vector<4x256xf32>
    %210 = arith.addf %200, %209 : vector<4x256xf32>
    %211 = vector.extract_strided_slice %7 {offsets = [0, 16], sizes = [4, 1], strides = [1, 1]} : vector<4x36xf32> to vector<4x1xf32>
    %212 = vector.extract_strided_slice %204 {offsets = [1, 0], sizes = [1, 256], strides = [1, 1]} : vector<4x256xf32> to vector<1x256xf32>
    %213 = vector.broadcast %211 : vector<4x1xf32> to vector<4x256xf32>
    %214 = vector.broadcast %212 : vector<1x256xf32> to vector<4x256xf32>
    %215 = arith.mulf %213, %214 : vector<4x256xf32>
    %216 = arith.addf %210, %215 : vector<4x256xf32>
    %217 = vector.extract_strided_slice %7 {offsets = [0, 25], sizes = [4, 1], strides = [1, 1]} : vector<4x36xf32> to vector<4x1xf32>
    %218 = vector.extract_strided_slice %204 {offsets = [2, 0], sizes = [1, 256], strides = [1, 1]} : vector<4x256xf32> to vector<1x256xf32>
    %219 = vector.broadcast %217 : vector<4x1xf32> to vector<4x256xf32>
    %220 = vector.broadcast %218 : vector<1x256xf32> to vector<4x256xf32>
    %221 = arith.mulf %219, %220 : vector<4x256xf32>
    %222 = arith.addf %216, %221 : vector<4x256xf32>
    %223 = vector.extract_strided_slice %7 {offsets = [0, 34], sizes = [4, 1], strides = [1, 1]} : vector<4x36xf32> to vector<4x1xf32>
    %224 = vector.extract_strided_slice %204 {offsets = [3, 0], sizes = [1, 256], strides = [1, 1]} : vector<4x256xf32> to vector<1x256xf32>
    %225 = vector.broadcast %223 : vector<4x1xf32> to vector<4x256xf32>
    %226 = vector.broadcast %224 : vector<1x256xf32> to vector<4x256xf32>
    %227 = arith.mulf %225, %226 : vector<4x256xf32>
    %228 = arith.addf %222, %227 : vector<4x256xf32>
    %c239_i32 = arith.constant 239 : i32
    %229 = tpu.dynamic_rotate %6 by %c239_i32 dim 1 : vector<4x256xf32>, i32 -> vector<4x256xf32>
    %c8 = arith.constant 8 : index
    %c0_18 = arith.constant 0 : index
    %230 = vector.load %arg4[%c8, %c0_18] : memref<9x256xf32, #tpu.memory_space<vmem>>, vector<1x256xf32>
    %231 = vector.broadcast %230 : vector<1x256xf32> to vector<4x256xf32>
    %232 = arith.mulf %229, %231 : vector<4x256xf32>
    %233 = vector.extract_strided_slice %7 {offsets = [0, 8], sizes = [4, 1], strides = [1, 1]} : vector<4x36xf32> to vector<4x1xf32>
    %234 = vector.extract_strided_slice %232 {offsets = [0, 0], sizes = [1, 256], strides = [1, 1]} : vector<4x256xf32> to vector<1x256xf32>
    %235 = vector.broadcast %233 : vector<4x1xf32> to vector<4x256xf32>
    %236 = vector.broadcast %234 : vector<1x256xf32> to vector<4x256xf32>
    %237 = arith.mulf %235, %236 : vector<4x256xf32>
    %238 = arith.addf %228, %237 : vector<4x256xf32>
    %239 = vector.extract_strided_slice %7 {offsets = [0, 17], sizes = [4, 1], strides = [1, 1]} : vector<4x36xf32> to vector<4x1xf32>
    %240 = vector.extract_strided_slice %232 {offsets = [1, 0], sizes = [1, 256], strides = [1, 1]} : vector<4x256xf32> to vector<1x256xf32>
    %241 = vector.broadcast %239 : vector<4x1xf32> to vector<4x256xf32>
    %242 = vector.broadcast %240 : vector<1x256xf32> to vector<4x256xf32>
    %243 = arith.mulf %241, %242 : vector<4x256xf32>
    %244 = arith.addf %238, %243 : vector<4x256xf32>
    %245 = vector.extract_strided_slice %7 {offsets = [0, 26], sizes = [4, 1], strides = [1, 1]} : vector<4x36xf32> to vector<4x1xf32>
    %246 = vector.extract_strided_slice %232 {offsets = [2, 0], sizes = [1, 256], strides = [1, 1]} : vector<4x256xf32> to vector<1x256xf32>
    %247 = vector.broadcast %245 : vector<4x1xf32> to vector<4x256xf32>
    %248 = vector.broadcast %246 : vector<1x256xf32> to vector<4x256xf32>
    %249 = arith.mulf %247, %248 : vector<4x256xf32>
    %250 = arith.addf %244, %249 : vector<4x256xf32>
    %251 = vector.extract_strided_slice %7 {offsets = [0, 35], sizes = [4, 1], strides = [1, 1]} : vector<4x36xf32> to vector<4x1xf32>
    %252 = vector.extract_strided_slice %232 {offsets = [3, 0], sizes = [1, 256], strides = [1, 1]} : vector<4x256xf32> to vector<1x256xf32>
    %253 = vector.broadcast %251 : vector<4x1xf32> to vector<4x256xf32>
    %254 = vector.broadcast %252 : vector<1x256xf32> to vector<4x256xf32>
    %255 = arith.mulf %253, %254 : vector<4x256xf32>
    %256 = arith.addf %250, %255 : vector<4x256xf32>
    %c0_19 = arith.constant 0 : index
    %c0_20 = arith.constant 0 : index
    %257 = vector.load %arg3[%c0_19, %c0_20] : memref<4x1xf32, #tpu.memory_space<vmem>>, vector<4x1xf32>
    %258 = vector.broadcast %257 : vector<4x1xf32> to vector<4x256xf32>
    %259 = arith.addf %256, %258 : vector<4x256xf32>
    %c0_21 = arith.constant 0 : index
    %c4 = arith.constant 4 : index
    %c0_22 = arith.constant 0 : index
    %260 = vector.load %arg5[%c0_21, %c4, %c0_22] : memref<1x8x256xf32, #tpu.memory_space<vmem>>, vector<1x4x256xf32>
    %261 = vector.shape_cast %260 : vector<1x4x256xf32> to vector<4x256xf32>
    %262 = vector.shape_cast %259 : vector<4x256xf32> to vector<1x4x256xf32>
    tpu.vector_store %arg5[%c0_21, %c4, %c0_22], %262 {strides = array<i32>} : memref<1x8x256xf32, #tpu.memory_space<vmem>>, vector<1x4x256xf32>,
    return
  }
  func.func @transform_0(%arg0: i32) -> (i32, i32, i32) {
    %c0_i32 = arith.constant 0 : i32
    %c0_i32_0 = arith.constant 0 : i32
    %c0_i32_1 = arith.constant 0 : i32
    return %arg0, %c0_i32, %c0_i32_0 : i32, i32, i32
  }
  func.func @transform_1(%arg0: i32) -> (i32, i32) {
    %c0_i32 = arith.constant 0 : i32
    %c0_i32_0 = arith.constant 0 : i32
    %c0_i32_1 = arith.constant 0 : i32
    return %c0_i32, %c0_i32_0 : i32, i32
  }
  func.func @transform_2(%arg0: i32) -> (i32, i32) {
    %c0_i32 = arith.constant 0 : i32
    %c0_i32_0 = arith.constant 0 : i32
    %c0_i32_1 = arith.constant 0 : i32
    return %c0_i32, %c0_i32_0 : i32, i32
  }
  func.func @transform_3(%arg0: i32) -> (i32, i32) {
    %c0_i32 = arith.constant 0 : i32
    %c0_i32_0 = arith.constant 0 : i32
    %c0_i32_1 = arith.constant 0 : i32
    return %c0_i32, %c0_i32_0 : i32, i32
  }
  func.func @transform_4(%arg0: i32) -> (i32, i32, i32) {
    %c0_i32 = arith.constant 0 : i32
    %c0_i32_0 = arith.constant 0 : i32
    %c0_i32_1 = arith.constant 0 : i32
    return %arg0, %c0_i32, %c0_i32_0 : i32, i32, i32
  }
}

</mosaic_0001>

<llo_original>
// kernel: tpu_custom_call.1
$region0: #{tpu_custom_call.1}
  #allocation0 [shape = 'u32[]', space=smem, size = 0x4, offset = 0x4, fixed_abs, tag = 'smem constant byte address 0x4 - core index']
  #allocation1 [shape = 'u32[144,128]{1,0:T(1,128)}', space=vmem, size = 0x12000, scoped, tag = 'internal scratch']
  %s0 = inlined_call_operand.hbm [shape: f32[2,4,256], index: 0, kind: input, shape index: {}]
  %s1 = inlined_call_operand.vmem [shape: f32[4,36], index: 1, kind: input, shape index: {}]
  %s2 = inlined_call_operand.vmem [shape: f32[4,1], index: 2, kind: input, shape index: {}]
  %s3 = inlined_call_operand.hbm [shape: f32[9,256], index: 3, kind: input, shape index: {}]
  %s4 = inlined_call_operand.hbm [shape: f32[2,8,256], index: 4, kind: output, shape index: {}]
  %s5 = sld [smem:[#allocation0]]
  $region57: #{tpu_custom_call.1} parent=0
    _
  %s7 = ssub.s32 1, %s5
  %s8 = scalar_select 0, %s7, %s5
  $region1: #{tpu_custom_call.1} parent=0
    #allocation2 [shape = 'u8[8192]{0}', space=vmem, size = 0x2000, scoped, tag = 'input window, operand 0']
    #allocation3 [shape = 's32[2]{0}', space=sflag, size = 0x8, scoped, tag = 'scoped memory for tpu_custom_call.1']
    #allocation4 [shape = 's32[2]{0}', space=sflag, size = 0x8, scoped, tag = 'scoped memory for tpu_custom_call.1']
    #allocation5 [shape = 'u8[16384]{0}', space=vmem, size = 0x4000, scoped, tag = 'input window, operand 3, single buffered']
    #allocation6 [shape = 's32[1]{0}', space=sflag, size = 0x4, scoped, tag = 'scoped memory for tpu_custom_call.1']
    #allocation7 [shape = 'u8[16384]{0}', space=vmem, size = 0x4000, scoped, tag = 'output window, operand 0']
    %9 = vsyncpa [#allocation3], 0
    %s10 = scalar_lea.sflag [#allocation3], 1
    %11 = vsyncpa %s10, 0
    %12 = vsyncpa [#allocation6], 0
    %13 = vsyncpa [#allocation4], 0
    %s14 = scalar_lea.sflag [#allocation4], 1
    %15 = vsyncpa %s14, 0
    loop: start=0, step=1, limit=4
    $region2: #{tpu_custom_call.1} parent=1 // loop_pre_header
      _
    $region3: #{tpu_custom_call.1} parent=1 // loop_header
      %s17 = sphi 0, %s21
      %p18 = scmp.ge.s32.totalorder %s17, 4
      %s27 = sphi 0, %s29
      %s30 = sphi 0, %s27
      %s31 = sphi 0, %s30
      %s47 = sphi 0, %s31
      %s51 = sphi 0, %s51
      %s53 = sphi 0, %s51
      %s54 = sphi 0, %s53
      %s68 = sphi 0, %s54
      %s72 = sphi 0, %s72
      %s74 = sphi 0, %s72
      %s75 = sphi 0, %s74
      %s89 = sphi 0, %s75
      %s93 = sphi 0, %s93
      %s95 = sphi 0, %s93
      %s96 = sphi 0, %s95
      %s110 = sphi 0, %s96
      %s116 = sphi 0, %s118
      %s119 = sphi 0, %s116
      %s120 = sphi 0, %s119
      %s136 = sphi 0, %s120
    $region4: #{tpu_custom_call.1} parent=1 // loop_header_branch
      %20 = sbr.rel (%p18) target = $region8
    $region5: #{tpu_custom_call.1} parent=1 // loop_body
      %s22 = ssub.s32 %s17, 1
      %s23 = ssub.s32 %s17, 2
      %s24 = sadd.s32 %s17, 1
      %s25 = ssub.s32 %s17, %s24
      %p26 = scmp.eq.s32.totalorder %s25, 0
      %s28 = sadd.s32 %s27, 1
      %s29 = scalar_select %p26, %s27, %s28
      %p32 = pneg %p26
      %p33 = scmp.eq.s32.totalorder %s17, 1
      %p34 = por %p32, %p33
      %p35 = scmp.ne.s32.totalorder %s27, %s30
      %p36 = scmp.eq.s32.totalorder %s17, 0
      %p37 = por %p35, %p36
      %p38 = scmp.ne.s32.totalorder %s27, %s30
      %p39 = scmp.eq.s32.totalorder %s22, 1
      %p40 = por %p38, %p39
      %p41 = scmp.ne.s32.totalorder %s30, %s31
      %p42 = scmp.eq.s32.totalorder %s22, 0
      %p43 = por %p41, %p42
      %p44 = scmp.ne.s32.totalorder %s30, %s31
      %p45 = scmp.eq.s32.totalorder %s23, 1
      %p46 = por %p44, %p45
      %p48 = scmp.ne.s32.totalorder %s31, %s47
      %p49 = scmp.eq.s32.totalorder %s23, 0
      %p50 = por %p48, %p49
      %s52 = sadd.s32 %s51, 1
      %p55 = scmp.eq.s32.totalorder %s17, 1
      %p56 = scmp.ne.s32.totalorder %s51, %s53
      %p57 = scmp.eq.s32.totalorder %s17, 0
      %p58 = por %p56, %p57
      %p59 = scmp.ne.s32.totalorder %s51, %s53
      %p60 = scmp.eq.s32.totalorder %s22, 1
      %p61 = por %p59, %p60
      %p62 = scmp.ne.s32.totalorder %s53, %s54
      %p63 = scmp.eq.s32.totalorder %s22, 0
      %p64 = por %p62, %p63
      %p65 = scmp.ne.s32.totalorder %s53, %s54
      %p66 = scmp.eq.s32.totalorder %s23, 1
      %p67 = por %p65, %p66
      %p69 = scmp.ne.s32.totalorder %s54, %s68
      %p70 = scmp.eq.s32.totalorder %s23, 0
      %p71 = por %p69, %p70
      %s73 = sadd.s32 %s72, 1
      %p76 = scmp.eq.s32.totalorder %s17, 1
      %p77 = scmp.ne.s32.totalorder %s72, %s74
      %p78 = scmp.eq.s32.totalorder %s17, 0
      %p79 = por %p77, %p78
      %p80 = scmp.ne.s32.totalorder %s72, %s74
      %p81 = scmp.eq.s32.totalorder %s22, 1
      %p82 = por %p80, %p81
      %p83 = scmp.ne.s32.totalorder %s74, %s75
      %p84 = scmp.eq.s32.totalorder %s22, 0
      %p85 = por %p83, %p84
      %p86 = scmp.ne.s32.totalorder %s74, %s75
      %p87 = scmp.eq.s32.totalorder %s23, 1
      %p88 = por %p86, %p87
      %p90 = scmp.ne.s32.totalorder %s75, %s89
      %p91 = scmp.eq.s32.totalorder %s23, 0
      %p92 = por %p90, %p91
      %s94 = sadd.s32 %s93, 1
      %p97 = scmp.eq.s32.totalorder %s17, 1
      %p98 = scmp.ne.s32.totalorder %s93, %s95
      %p99 = scmp.eq.s32.totalorder %s17, 0
      %p100 = por %p98, %p99
      %p101 = scmp.ne.s32.totalorder %s93, %s95
      %p102 = scmp.eq.s32.totalorder %s22, 1
      %p103 = por %p101, %p102
      %p104 = scmp.ne.s32.totalorder %s95, %s96
      %p105 = scmp.eq.s32.totalorder %s22, 0
      %p106 = por %p104, %p105
      %p107 = scmp.ne.s32.totalorder %s95, %s96
      %p108 = scmp.eq.s32.totalorder %s23, 1
      %p109 = por %p107, %p108
      %p111 = scmp.ne.s32.totalorder %s96, %s110
      %p112 = scmp.eq.s32.totalorder %s23, 0
      %p113 = por %p111, %p112
      %s114 = ssub.s32 %s17, %s24
      %p115 = scmp.eq.s32.totalorder %s114, 0
      %s117 = sadd.s32 %s116, 1
      %s118 = scalar_select %p115, %s116, %s117
      %p121 = pneg %p115
      %p122 = scmp.eq.s32.totalorder %s17, 1
      %p123 = por %p121, %p122
      %p124 = scmp.ne.s32.totalorder %s116, %s119
      %p125 = scmp.eq.s32.totalorder %s17, 0
      %p126 = por %p124, %p125
      %p127 = scmp.ne.s32.totalorder %s116, %s119
      %p128 = scmp.eq.s32.totalorder %s22, 1
      %p129 = por %p127, %p128
      %p130 = scmp.ne.s32.totalorder %s119, %s120
      %p131 = scmp.eq.s32.totalorder %s22, 0
      %p132 = por %p130, %p131
      %p133 = scmp.ne.s32.totalorder %s119, %s120
      %p134 = scmp.eq.s32.totalorder %s23, 1
      %p135 = por %p133, %p134
      %p137 = scmp.ne.s32.totalorder %s120, %s136
      %p138 = scmp.eq.s32.totalorder %s23, 0
      %p139 = por %p137, %p138
      %p140 = scmp.le.s32.totalorder 1, %s17
      %p141 = scmp.lt.s32.totalorder %s17, 3
      %p142 = pnand %p140, %p141
      %p143 = pneg %p142
      // Predicated region
      $region9: #{tpu_custom_call.1} parent=5 // pred_check
        _
      $region10: #{tpu_custom_call.1} parent=5 // pred_check_branch
        %145 = sbr.rel (%p142) target = $region12
      $region11: #{tpu_custom_call.1} parent=5 // pred_region
        %s146 = ssub.s32 %s17, 1
        // Predicated region
        $region13: #{tpu_custom_call.1} parent=11 // pred_check
          %p147 = pneg %p64
        $region14: #{tpu_custom_call.1} parent=11 // pred_check_branch
          %149 = sbr.rel (%p147) target = $region16
        $region15: #{tpu_custom_call.1} parent=11 // pred_region
          _
        $region16: #{tpu_custom_call.1} parent=11 // pred_fallthru
          _
        // Predicated region
        $region17: #{tpu_custom_call.1} parent=11 // pred_check
          %p150 = pneg %p85
        $region18: #{tpu_custom_call.1} parent=11 // pred_check_branch
          %152 = sbr.rel (%p150) target = $region20
        $region19: #{tpu_custom_call.1} parent=11 // pred_region
          _
        $region20: #{tpu_custom_call.1} parent=11 // pred_fallthru
          _
        // Predicated region
        $region21: #{tpu_custom_call.1} parent=11 // pred_check
          %p153 = pneg %p106
        $region22: #{tpu_custom_call.1} parent=11 // pred_check_branch
          %155 = sbr.rel (%p153) target = $region24
        $region23: #{tpu_custom_call.1} parent=11 // pred_region
          %s157 = ssub.s32 512, 512
          %158 = vsyncadd [#allocation6], %s157
          %s159 = sshll.u32 [#allocation5], 4
          %s160 = int_to_ptr.vmem [resolvable:$true] %s159
          %165 = dma.hbm_to_vmem [thread:$0]  %s3, 512, %s160, [#allocation6], 256, 256, 16
        $region24: #{tpu_custom_call.1} parent=11 // pred_fallthru
          _
      $region12: #{tpu_custom_call.1} parent=5 // pred_fallthru
        _
      %p166 = scmp.lt.s32.totalorder %s17, 2
      // Predicated region
      $region25: #{tpu_custom_call.1} parent=5 // pred_check
        %p167 = pneg %p166
      $region26: #{tpu_custom_call.1} parent=5 // pred_check_branch
        %169 = sbr.rel (%p167) target = $region28
      $region27: #{tpu_custom_call.1} parent=5 // pred_region
        // Predicated region
        $region29: #{tpu_custom_call.1} parent=27 // pred_check
          %p170 = pneg %p37
        $region30: #{tpu_custom_call.1} parent=27 // pred_check_branch
          %172 = sbr.rel (%p170) target = $region32
        $region31: #{tpu_custom_call.1} parent=27 // pred_region
          %s173 = sand.u32 %s27, 1
          %s174 = scalar_lea.sflag [#allocation3], %s173
          %s175 = sand.u32 %s27, 1
          %s176 = smul.addr %s175, 8
          %s177 = scalar_lea.vmem [#allocation2], %s176
          %s179 = ssub.s32 128, 128
          %180 = vsyncadd %s174, %s179
          %s181 = smul.addr %s17, 2
          %s182 = smul.addr %s181, 64
          %s183 = scalar_lea.hbm %s0, %s182
          %s185 = sshll.u32 %s177, 4
          %s186 = int_to_ptr.vmem [resolvable:$true] %s185
          %188 = dma.hbm_to_vmem [thread:$0]  %s183, 128, %s186, %s174
        $region32: #{tpu_custom_call.1} parent=27 // pred_fallthru
          _
      $region28: #{tpu_custom_call.1} parent=5 // pred_fallthru
        _
      %p189 = scmp.le.s32.totalorder 1, %s17
      %p190 = scmp.lt.s32.totalorder %s17, 3
      %p191 = pnand %p189, %p190
      %p192 = pneg %p191
      // Predicated region
      $region33: #{tpu_custom_call.1} parent=5 // pred_check
        _
      $region34: #{tpu_custom_call.1} parent=5 // pred_check_branch
        %194 = sbr.rel (%p191) target = $region36
      $region35: #{tpu_custom_call.1} parent=5 // pred_region
        %s195 = ssub.s32 %s17, 1
        %s196 = sand.u32 %s30, 1
        %s197 = scalar_lea.sflag [#allocation3], %s196
        %s198 = sand.u32 %s30, 1
        %s199 = smul.addr %s198, 8
        %s200 = scalar_lea.vmem [#allocation2], %s199
        // Predicated region
        $region37: #{tpu_custom_call.1} parent=35 // pred_check
          %p201 = pneg %p43
        $region38: #{tpu_custom_call.1} parent=35 // pred_check_branch
          %203 = sbr.rel (%p201) target = $region40
        $region39: #{tpu_custom_call.1} parent=35 // pred_region
          %204 = dma.done %s197, 128
        $region40: #{tpu_custom_call.1} parent=35 // pred_fallthru
          _
        // Predicated region
        $region41: #{tpu_custom_call.1} parent=35 // pred_check
          %p205 = pneg %p106
        $region42: #{tpu_custom_call.1} parent=35 // pred_check_branch
          %207 = sbr.rel (%p205) target = $region44
        $region43: #{tpu_custom_call.1} parent=35 // pred_region
          %208 = dma.done [#allocation6], 512
        $region44: #{tpu_custom_call.1} parent=35 // pred_fallthru
          _
        %s209 = sand.u32 %s30, 1
        %s210 = scalar_lea.sflag [#allocation3], %s209
        %s211 = sand.u32 %s30, 1
        %s212 = smul.addr %s211, 8
        %s213 = scalar_lea.vmem [#allocation2], %s212
        %p214 = pneg %p43
        %p215 = pneg %p40
        %p216 = pneg %p64
        %p217 = pneg %p61
        %p218 = pneg %p85
        %p219 = pneg %p82
        %p220 = pneg %p106
        %p221 = pneg %p103
        %p222 = pneg %p132
        %p223 = pneg %p129
        %s224 = sand.u32 %s119, 1
        %s225 = scalar_lea.sflag [#allocation4], %s224
        %s226 = sand.u32 %s119, 1
        %s227 = smul.addr %s226, 16
        %s228 = scalar_lea.vmem [#allocation7], %s227
        %v229 = vld [vmem:[%s200] sm:$0xff]
        %v231 = vcombine.high %v229, %v229
        %233 = vst [vmem:[%s228] sm:$0xf] %v229
        %234 = vst [vmem:[%s228 + $0x8] sm:$0xf] %v231
        %v235 = vld [vmem:[%s200] sm:$0xff]
        %v236 = vld [vmem:[%s1] sm:$0xf]
        %v238 = vcombine.high %v235, %v235
        %240 = vrot.lane.b32.xlu0 %v235, 17
        %v241 = vpop.permute.xlu0 %240
        %242 = vrot.lane.b32.xlu0 %v238, 17
        %v243 = vpop.permute.xlu0 %242
        %v244 = vlaneseq
        %v245 = vand.u32 %v244, 127
        %vm246 = vcmp.lt.s32.totalorder %v245, 17
        %v247 = vsel %vm246, %v241, %v243
        %v248 = vsel %vm246, %v243, %v241
        %v249 = vld [vmem:[#allocation5] ss:$8 sm:$0x3]
        %v251 = vlaneseq
        %v252 = vshrl.u32 %v251, 7
        %v253 = vsub.s32 0, %v252
        %v254 = vrot.slane %v249, %v253
        %v255 = vlaneseq
        %v256 = vshrl.u32 %v255, 7
        %v257 = vsub.s32 1, %v256
        %v258 = vrot.slane %v249, %v257
        %v261 = vmul.f32 %v248, %v254
        %v262 = vmul.f32 %v247, %v258
        %264 = vset.pattern.permute.xlu0 0
        %265 = vperm.xlu0 %264, %v236
        %v266 = vpop.permute.xlu0 %265
        %v268 = vlaneseq
        %v269 = vshrl.u32 %v268, 7
        %v270 = vsub.s32 0, %v269
        %v271 = vrot.slane %v261, %v270
        %v272 = vlaneseq
        %v273 = vshrl.u32 %v272, 7
        %v274 = vsub.s32 0, %v273
        %v275 = vrot.slane %v262, %v274
        %v276 = vmul.f32 %v266, %v271
        %v277 = vmul.f32 %v266, %v275
        %v278 = vadd.f32 %v276, 0.0
        %v279 = vadd.f32 %v277, 0.0
        %280 = vset.pattern.permute.xlu0 9
        %281 = vperm.xlu0 %280, %v236
        %v282 = vpop.permute.xlu0 %281
        %v284 = vlaneseq
        %v285 = vshrl.u32 %v284, 7
        %v286 = vsub.s32 1, %v285
        %v287 = vrot.slane %v261, %v286
        %v288 = vlaneseq
        %v289 = vshrl.u32 %v288, 7
        %v290 = vsub.s32 1, %v289
        %v291 = vrot.slane %v262, %v290
        %v292 = vmul.f32 %v282, %v287
        %v293 = vmul.f32 %v282, %v291
        %v294 = vadd.f32 %v278, %v292
        %v295 = vadd.f32 %v279, %v293
        %296 = vset.pattern.permute.xlu0 18
        %297 = vperm.xlu0 %296, %v236
        %v298 = vpop.permute.xlu0 %297
        %v300 = vlaneseq
        %v301 = vshrl.u32 %v300, 7
        %v302 = vsub.s32 2, %v301
        %v303 = vrot.slane %v261, %v302
        %v304 = vlaneseq
        %v305 = vshrl.u32 %v304, 7
        %v306 = vsub.s32 2, %v305
        %v307 = vrot.slane %v262, %v306
        %v308 = vmul.f32 %v298, %v303
        %v309 = vmul.f32 %v298, %v307
        %v310 = vadd.f32 %v294, %v308
        %v311 = vadd.f32 %v295, %v309
        %312 = vset.pattern.permute.xlu0 27
        %313 = vperm.xlu0 %312, %v236
        %v314 = vpop.permute.xlu0 %313
        %v316 = vlaneseq
        %v317 = vshrl.u32 %v316, 7
        %v318 = vsub.s32 3, %v317
        %v319 = vrot.slane %v261, %v318
        %v320 = vlaneseq
        %v321 = vshrl.u32 %v320, 7
        %v322 = vsub.s32 3, %v321
        %v323 = vrot.slane %v262, %v322
        %v324 = vmul.f32 %v314, %v319
        %v325 = vmul.f32 %v314, %v323
        %v326 = vadd.f32 %v310, %v324
        %v327 = vadd.f32 %v311, %v325
        %328 = vrot.lane.b32.xlu0 %v235, 16
        %v329 = vpop.permute.xlu0 %328
        %330 = vrot.lane.b32.xlu0 %v238, 16
        %v331 = vpop.permute.xlu0 %330
        %vm332 = vcmp.lt.s32.totalorder %v245, 16
        %v333 = vsel %vm332, %v329, %v331
        %v334 = vsel %vm332, %v331, %v329
        %s335 = scalar_lea.vmem [#allocation5], 1
        %v336 = vld [vmem:[%s335] ss:$8 sm:$0x3]
        %v338 = vlaneseq
        %v339 = vshrl.u32 %v338, 7
        %v340 = vsub.s32 0, %v339
        %v341 = vrot.slane %v336, %v340
        %v342 = vlaneseq
        %v343 = vshrl.u32 %v342, 7
        %v344 = vsub.s32 1, %v343
        %v345 = vrot.slane %v336, %v344
        %v348 = vmul.f32 %v334, %v341
        %v349 = vmul.f32 %v333, %v345
        %350 = vset.pattern.permute.xlu0 1
        %351 = vperm.xlu0 %350, %v236
        %v352 = vpop.permute.xlu0 %351
        %v354 = vlaneseq
        %v355 = vshrl.u32 %v354, 7
        %v356 = vsub.s32 0, %v355
        %v357 = vrot.slane %v348, %v356
        %v358 = vlaneseq
        %v359 = vshrl.u32 %v358, 7
        %v360 = vsub.s32 0, %v359
        %v361 = vrot.slane %v349, %v360
        %v362 = vmul.f32 %v352, %v357
        %v363 = vmul.f32 %v352, %v361
        %v364 = vadd.f32 %v326, %v362
        %v365 = vadd.f32 %v327, %v363
        %366 = vset.pattern.permute.xlu0 10
        %367 = vperm.xlu0 %366, %v236
        %v368 = vpop.permute.xlu0 %367
        %v370 = vlaneseq
        %v371 = vshrl.u32 %v370, 7
        %v372 = vsub.s32 1, %v371
        %v373 = vrot.slane %v348, %v372
        %v374 = vlaneseq
        %v375 = vshrl.u32 %v374, 7
        %v376 = vsub.s32 1, %v375
        %v377 = vrot.slane %v349, %v376
        %v378 = vmul.f32 %v368, %v373
        %v379 = vmul.f32 %v368, %v377
        %v380 = vadd.f32 %v364, %v378
        %v381 = vadd.f32 %v365, %v379
        %382 = vset.pattern.permute.xlu0 19
        %383 = vperm.xlu0 %382, %v236
        %v384 = vpop.permute.xlu0 %383
        %v386 = vlaneseq
        %v387 = vshrl.u32 %v386, 7
        %v388 = vsub.s32 2, %v387
        %v389 = vrot.slane %v348, %v388
        %v390 = vlaneseq
        %v391 = vshrl.u32 %v390, 7
        %v392 = vsub.s32 2, %v391
        %v393 = vrot.slane %v349, %v392
        %v394 = vmul.f32 %v384, %v389
        %v395 = vmul.f32 %v384, %v393
        %v396 = vadd.f32 %v380, %v394
        %v397 = vadd.f32 %v381, %v395
        %398 = vset.pattern.permute.xlu0 28
        %399 = vperm.xlu0 %398, %v236
        %v400 = vpop.permute.xlu0 %399
        %v402 = vlaneseq
        %v403 = vshrl.u32 %v402, 7
        %v404 = vsub.s32 3, %v403
        %v405 = vrot.slane %v348, %v404
        %v406 = vlaneseq
        %v407 = vshrl.u32 %v406, 7
        %v408 = vsub.s32 3, %v407
        %v409 = vrot.slane %v349, %v408
        %v410 = vmul.f32 %v400, %v405
        %v411 = vmul.f32 %v400, %v409
        %v412 = vadd.f32 %v396, %v410
        %v413 = vadd.f32 %v397, %v411
        %414 = vrot.lane.b32.xlu0 %v235, 15
        %v415 = vpop.permute.xlu0 %414
        %416 = vrot.lane.b32.xlu0 %v238, 15
        %v417 = vpop.permute.xlu0 %416
        %vm418 = vcmp.lt.s32.totalorder %v245, 15
        %v419 = vsel %vm418, %v415, %v417
        %v420 = vsel %vm418, %v417, %v415
        %s421 = scalar_lea.vmem [#allocation5], 2
        %v422 = vld [vmem:[%s421] ss:$8 sm:$0x3]
        %v424 = vlaneseq
        %v425 = vshrl.u32 %v424, 7
        %v426 = vsub.s32 0, %v425
        %v427 = vrot.slane %v422, %v426
        %v428 = vlaneseq
        %v429 = vshrl.u32 %v428, 7
        %v430 = vsub.s32 1, %v429
        %v431 = vrot.slane %v422, %v430
        %v434 = vmul.f32 %v420, %v427
        %v435 = vmul.f32 %v419, %v431
        %436 = vset.pattern.permute.xlu0 2
        %437 = vperm.xlu0 %436, %v236
        %v438 = vpop.permute.xlu0 %437
        %v440 = vlaneseq
        %v441 = vshrl.u32 %v440, 7
        %v442 = vsub.s32 0, %v441
        %v443 = vrot.slane %v434, %v442
        %v444 = vlaneseq
        %v445 = vshrl.u32 %v444, 7
        %v446 = vsub.s32 0, %v445
        %v447 = vrot.slane %v435, %v446
        %v448 = vmul.f32 %v438, %v443
        %v449 = vmul.f32 %v438, %v447
        %v450 = vadd.f32 %v412, %v448
        %v451 = vadd.f32 %v413, %v449
        %452 = vset.pattern.permute.xlu0 11
        %453 = vperm.xlu0 %452, %v236
        %v454 = vpop.permute.xlu0 %453
        %v456 = vlaneseq
        %v457 = vshrl.u32 %v456, 7
        %v458 = vsub.s32 1, %v457
        %v459 = vrot.slane %v434, %v458
        %v460 = vlaneseq
        %v461 = vshrl.u32 %v460, 7
        %v462 = vsub.s32 1, %v461
        %v463 = vrot.slane %v435, %v462
        %v464 = vmul.f32 %v454, %v459
        %v465 = vmul.f32 %v454, %v463
        %v466 = vadd.f32 %v450, %v464
        %v467 = vadd.f32 %v451, %v465
        %468 = vset.pattern.permute.xlu0 20
        %469 = vperm.xlu0 %468, %v236
        %v470 = vpop.permute.xlu0 %469
        %v472 = vlaneseq
        %v473 = vshrl.u32 %v472, 7
        %v474 = vsub.s32 2, %v473
        %v475 = vrot.slane %v434, %v474
        %v476 = vlaneseq
        %v477 = vshrl.u32 %v476, 7
        %v478 = vsub.s32 2, %v477
        %v479 = vrot.slane %v435, %v478
        %v480 = vmul.f32 %v470, %v475
        %v481 = vmul.f32 %v470, %v479
        %v482 = vadd.f32 %v466, %v480
        %v483 = vadd.f32 %v467, %v481
        %484 = vset.pattern.permute.xlu0 29
        %485 = vperm.xlu0 %484, %v236
        %v486 = vpop.permute.xlu0 %485
        %v488 = vlaneseq
        %v489 = vshrl.u32 %v488, 7
        %v490 = vsub.s32 3, %v489
        %v491 = vrot.slane %v434, %v490
        %v492 = vlaneseq
        %v493 = vshrl.u32 %v492, 7
        %v494 = vsub.s32 3, %v493
        %v495 = vrot.slane %v435, %v494
        %v496 = vmul.f32 %v486, %v491
        %v497 = vmul.f32 %v486, %v495
        %v498 = vadd.f32 %v482, %v496
        %v499 = vadd.f32 %v483, %v497
        %500 = vrot.lane.b32.xlu0 %v235, 1
        %v501 = vpop.permute.xlu0 %500
        %502 = vrot.lane.b32.xlu0 %v238, 1
        %v503 = vpop.permute.xlu0 %502
        %vm504 = vcmp.lt.s32.totalorder %v245, 1
        %v505 = vsel %vm504, %v501, %v503
        %v506 = vsel %vm504, %v503, %v501
        %s507 = scalar_lea.vmem [#allocation5], 3
        %v508 = vld [vmem:[%s507] ss:$8 sm:$0x3]
        %v510 = vlaneseq
        %v511 = vshrl.u32 %v510, 7
        %v512 = vsub.s32 0, %v511
        %v513 = vrot.slane %v508, %v512
        %v514 = vlaneseq
        %v515 = vshrl.u32 %v514, 7
        %v516 = vsub.s32 1, %v515
        %v517 = vrot.slane %v508, %v516
        %v520 = vmul.f32 %v506, %v513
        %v521 = vmul.f32 %v505, %v517
        %522 = vset.pattern.permute.xlu0 3
        %523 = vperm.xlu0 %522, %v236
        %v524 = vpop.permute.xlu0 %523
        %v526 = vlaneseq
        %v527 = vshrl.u32 %v526, 7
        %v528 = vsub.s32 0, %v527
        %v529 = vrot.slane %v520, %v528
        %v530 = vlaneseq
        %v531 = vshrl.u32 %v530, 7
        %v532 = vsub.s32 0, %v531
        %v533 = vrot.slane %v521, %v532
        %v534 = vmul.f32 %v524, %v529
        %v535 = vmul.f32 %v524, %v533
        %v536 = vadd.f32 %v498, %v534
        %v537 = vadd.f32 %v499, %v535
        %538 = vset.pattern.permute.xlu0 12
        %539 = vperm.xlu0 %538, %v236
        %v540 = vpop.permute.xlu0 %539
        %v542 = vlaneseq
        %v543 = vshrl.u32 %v542, 7
        %v544 = vsub.s32 1, %v543
        %v545 = vrot.slane %v520, %v544
        %v546 = vlaneseq
        %v547 = vshrl.u32 %v546, 7
        %v548 = vsub.s32 1, %v547
        %v549 = vrot.slane %v521, %v548
        %v550 = vmul.f32 %v540, %v545
        %v551 = vmul.f32 %v540, %v549
        %v552 = vadd.f32 %v536, %v550
        %v553 = vadd.f32 %v537, %v551
        %554 = vset.pattern.permute.xlu0 21
        %555 = vperm.xlu0 %554, %v236
        %v556 = vpop.permute.xlu0 %555
        %v558 = vlaneseq
        %v559 = vshrl.u32 %v558, 7
        %v560 = vsub.s32 2, %v559
        %v561 = vrot.slane %v520, %v560
        %v562 = vlaneseq
        %v563 = vshrl.u32 %v562, 7
        %v564 = vsub.s32 2, %v563
        %v565 = vrot.slane %v521, %v564
        %v566 = vmul.f32 %v556, %v561
        %v567 = vmul.f32 %v556, %v565
        %v568 = vadd.f32 %v552, %v566
        %v569 = vadd.f32 %v553, %v567
        %570 = vset.pattern.permute.xlu0 30
        %571 = vperm.xlu0 %570, %v236
        %v572 = vpop.permute.xlu0 %571
        %v574 = vlaneseq
        %v575 = vshrl.u32 %v574, 7
        %v576 = vsub.s32 3, %v575
        %v577 = vrot.slane %v520, %v576
        %v578 = vlaneseq
        %v579 = vshrl.u32 %v578, 7
        %v580 = vsub.s32 3, %v579
        %v581 = vrot.slane %v521, %v580
        %v582 = vmul.f32 %v572, %v577
        %v583 = vmul.f32 %v572, %v581
        %v584 = vadd.f32 %v568, %v582
        %v585 = vadd.f32 %v569, %v583
        %586 = vset.pattern.permute.xlu0 4
        %587 = vperm.xlu0 %586, %v236
        %v588 = vpop.permute.xlu0 %587
        %v590 = vlaneseq
        %v591 = vshrl.u32 %v590, 7
        %v592 = vsub.s32 0, %v591
        %v593 = vrot.slane %v235, %v592
        %v594 = vlaneseq
        %v595 = vshrl.u32 %v594, 7
        %v596 = vsub.s32 4, %v595
        %v597 = vrot.slane %v235, %v596
        %v600 = vlaneseq
        %v601 = vshrl.u32 %v600, 7
        %v602 = vsub.s32 0, %v601
        %v603 = vrot.slane %v593, %v602
        %v604 = vlaneseq
        %v605 = vshrl.u32 %v604, 7
        %v606 = vsub.s32 0, %v605
        %v607 = vrot.slane %v597, %v606
        %v608 = vmul.f32 %v588, %v603
        %v609 = vmul.f32 %v588, %v607
        %v610 = vadd.f32 %v584, %v608
        %v611 = vadd.f32 %v585, %v609
        %612 = vset.pattern.permute.xlu0 13
        %613 = vperm.xlu0 %612, %v236
        %v614 = vpop.permute.xlu0 %613
        %v616 = vlaneseq
        %v617 = vshrl.u32 %v616, 7
        %v618 = vsub.s32 1, %v617
        %v619 = vrot.slane %v235, %v618
        %v620 = vlaneseq
        %v621 = vshrl.u32 %v620, 7
        %v622 = vsub.s32 5, %v621
        %v623 = vrot.slane %v235, %v622
        %v626 = vlaneseq
        %v627 = vshrl.u32 %v626, 7
        %v628 = vsub.s32 1, %v627
        %v629 = vrot.slane %v619, %v628
        %v630 = vlaneseq
        %v631 = vshrl.u32 %v630, 7
        %v632 = vsub.s32 1, %v631
        %v633 = vrot.slane %v623, %v632
        %v634 = vmul.f32 %v614, %v629
        %v635 = vmul.f32 %v614, %v633
        %v636 = vadd.f32 %v610, %v634
        %v637 = vadd.f32 %v611, %v635
        %638 = vset.pattern.permute.xlu0 22
        %639 = vperm.xlu0 %638, %v236
        %v640 = vpop.permute.xlu0 %639
        %v642 = vlaneseq
        %v643 = vshrl.u32 %v642, 7
        %v644 = vsub.s32 2, %v643
        %v645 = vrot.slane %v235, %v644
        %v646 = vlaneseq
        %v647 = vshrl.u32 %v646, 7
        %v648 = vsub.s32 6, %v647
        %v649 = vrot.slane %v235, %v648
        %v652 = vlaneseq
        %v653 = vshrl.u32 %v652, 7
        %v654 = vsub.s32 2, %v653
        %v655 = vrot.slane %v645, %v654
        %v656 = vlaneseq
        %v657 = vshrl.u32 %v656, 7
        %v658 = vsub.s32 2, %v657
        %v659 = vrot.slane %v649, %v658
        %v660 = vmul.f32 %v640, %v655
        %v661 = vmul.f32 %v640, %v659
        %v662 = vadd.f32 %v636, %v660
        %v663 = vadd.f32 %v637, %v661
        %664 = vset.pattern.permute.xlu0 31
        %665 = vperm.xlu0 %664, %v236
        %v666 = vpop.permute.xlu0 %665
        %v668 = vlaneseq
        %v669 = vshrl.u32 %v668, 7
        %v670 = vsub.s32 3, %v669
        %v671 = vrot.slane %v235, %v670
        %v672 = vlaneseq
        %v673 = vshrl.u32 %v672, 7
        %v674 = vsub.s32 7, %v673
        %v675 = vrot.slane %v235, %v674
        %v678 = vlaneseq
        %v679 = vshrl.u32 %v678, 7
        %v680 = vsub.s32 3, %v679
        %v681 = vrot.slane %v671, %v680
        %v682 = vlaneseq
        %v683 = vshrl.u32 %v682, 7
        %v684 = vsub.s32 3, %v683
        %v685 = vrot.slane %v675, %v684
        %v686 = vmul.f32 %v666, %v681
        %v687 = vmul.f32 %v666, %v685
        %v688 = vadd.f32 %v662, %v686
        %v689 = vadd.f32 %v663, %v687
        %690 = vrot.lane.b32.xlu0 %v235, 127
        %v691 = vpop.permute.xlu0 %690
        %692 = vrot.lane.b32.xlu0 %v238, 127
        %v693 = vpop.permute.xlu0 %692
        %vm694 = vcmp.lt.s32.totalorder %v245, 127
        %v695 = vsel %vm694, %v691, %v693
        %v696 = vsel %vm694, %v693, %v691
        %s697 = scalar_lea.vmem [#allocation5], 5
        %v698 = vld [vmem:[%s697] ss:$8 sm:$0x3]
        %v700 = vlaneseq
        %v701 = vshrl.u32 %v700, 7
        %v702 = vsub.s32 0, %v701
        %v703 = vrot.slane %v698, %v702
        %v704 = vlaneseq
        %v705 = vshrl.u32 %v704, 7
        %v706 = vsub.s32 1, %v705
        %v707 = vrot.slane %v698, %v706
        %v710 = vmul.f32 %v695, %v703
        %v711 = vmul.f32 %v696, %v707
        %712 = vset.pattern.permute.xlu0 5
        %713 = vperm.xlu0 %712, %v236
        %v714 = vpop.permute.xlu0 %713
        %v716 = vlaneseq
        %v717 = vshrl.u32 %v716, 7
        %v718 = vsub.s32 0, %v717
        %v719 = vrot.slane %v710, %v718
        %v720 = vlaneseq
        %v721 = vshrl.u32 %v720, 7
        %v722 = vsub.s32 0, %v721
        %v723 = vrot.slane %v711, %v722
        %v724 = vmul.f32 %v714, %v719
        %v725 = vmul.f32 %v714, %v723
        %v726 = vadd.f32 %v688, %v724
        %v727 = vadd.f32 %v689, %v725
        %728 = vset.pattern.permute.xlu0 14
        %729 = vperm.xlu0 %728, %v236
        %v730 = vpop.permute.xlu0 %729
        %v732 = vlaneseq
        %v733 = vshrl.u32 %v732, 7
        %v734 = vsub.s32 1, %v733
        %v735 = vrot.slane %v710, %v734
        %v736 = vlaneseq
        %v737 = vshrl.u32 %v736, 7
        %v738 = vsub.s32 1, %v737
        %v739 = vrot.slane %v711, %v738
        %v740 = vmul.f32 %v730, %v735
        %v741 = vmul.f32 %v730, %v739
        %v742 = vadd.f32 %v726, %v740
        %v743 = vadd.f32 %v727, %v741
        %744 = vset.pattern.permute.xlu0 23
        %745 = vperm.xlu0 %744, %v236
        %v746 = vpop.permute.xlu0 %745
        %v748 = vlaneseq
        %v749 = vshrl.u32 %v748, 7
        %v750 = vsub.s32 2, %v749
        %v751 = vrot.slane %v710, %v750
        %v752 = vlaneseq
        %v753 = vshrl.u32 %v752, 7
        %v754 = vsub.s32 2, %v753
        %v755 = vrot.slane %v711, %v754
        %v756 = vmul.f32 %v746, %v751
        %v757 = vmul.f32 %v746, %v755
        %v758 = vadd.f32 %v742, %v756
        %v759 = vadd.f32 %v743, %v757
        %760 = vset.pattern.permute.xlu0 32
        %761 = vperm.xlu0 %760, %v236
        %v762 = vpop.permute.xlu0 %761
        %v764 = vlaneseq
        %v765 = vshrl.u32 %v764, 7
        %v766 = vsub.s32 3, %v765
        %v767 = vrot.slane %v710, %v766
        %v768 = vlaneseq
        %v769 = vshrl.u32 %v768, 7
        %v770 = vsub.s32 3, %v769
        %v771 = vrot.slane %v711, %v770
        %v772 = vmul.f32 %v762, %v767
        %v773 = vmul.f32 %v762, %v771
        %v774 = vadd.f32 %v758, %v772
        %v775 = vadd.f32 %v759, %v773
        %776 = vrot.lane.b32.xlu0 %v235, 113
        %v777 = vpop.permute.xlu0 %776
        %778 = vrot.lane.b32.xlu0 %v238, 113
        %v779 = vpop.permute.xlu0 %778
        %vm780 = vcmp.lt.s32.totalorder %v245, 113
        %v781 = vsel %vm780, %v777, %v779
        %v782 = vsel %vm780, %v779, %v777
        %s783 = scalar_lea.vmem [#allocation5], 6
        %v784 = vld [vmem:[%s783] ss:$8 sm:$0x3]
        %v786 = vlaneseq
        %v787 = vshrl.u32 %v786, 7
        %v788 = vsub.s32 0, %v787
        %v789 = vrot.slane %v784, %v788
        %v790 = vlaneseq
        %v791 = vshrl.u32 %v790, 7
        %v792 = vsub.s32 1, %v791
        %v793 = vrot.slane %v784, %v792
        %v796 = vmul.f32 %v781, %v789
        %v797 = vmul.f32 %v782, %v793
        %798 = vset.pattern.permute.xlu0 6
        %799 = vperm.xlu0 %798, %v236
        %v800 = vpop.permute.xlu0 %799
        %v802 = vlaneseq
        %v803 = vshrl.u32 %v802, 7
        %v804 = vsub.s32 0, %v803
        %v805 = vrot.slane %v796, %v804
        %v806 = vlaneseq
        %v807 = vshrl.u32 %v806, 7
        %v808 = vsub.s32 0, %v807
        %v809 = vrot.slane %v797, %v808
        %v810 = vmul.f32 %v800, %v805
        %v811 = vmul.f32 %v800, %v809
        %v812 = vadd.f32 %v774, %v810
        %v813 = vadd.f32 %v775, %v811
        %814 = vset.pattern.permute.xlu0 15
        %815 = vperm.xlu0 %814, %v236
        %v816 = vpop.permute.xlu0 %815
        %v818 = vlaneseq
        %v819 = vshrl.u32 %v818, 7
        %v820 = vsub.s32 1, %v819
        %v821 = vrot.slane %v796, %v820
        %v822 = vlaneseq
        %v823 = vshrl.u32 %v822, 7
        %v824 = vsub.s32 1, %v823
        %v825 = vrot.slane %v797, %v824
        %v826 = vmul.f32 %v816, %v821
        %v827 = vmul.f32 %v816, %v825
        %v828 = vadd.f32 %v812, %v826
        %v829 = vadd.f32 %v813, %v827
        %830 = vset.pattern.permute.xlu0 24
        %831 = vperm.xlu0 %830, %v236
        %v832 = vpop.permute.xlu0 %831
        %v834 = vlaneseq
        %v835 = vshrl.u32 %v834, 7
        %v836 = vsub.s32 2, %v835
        %v837 = vrot.slane %v796, %v836
        %v838 = vlaneseq
        %v839 = vshrl.u32 %v838, 7
        %v840 = vsub.s32 2, %v839
        %v841 = vrot.slane %v797, %v840
        %v842 = vmul.f32 %v832, %v837
        %v843 = vmul.f32 %v832, %v841
        %v844 = vadd.f32 %v828, %v842
        %v845 = vadd.f32 %v829, %v843
        %846 = vset.pattern.permute.xlu0 33
        %847 = vperm.xlu0 %846, %v236
        %v848 = vpop.permute.xlu0 %847
        %v850 = vlaneseq
        %v851 = vshrl.u32 %v850, 7
        %v852 = vsub.s32 3, %v851
        %v853 = vrot.slane %v796, %v852
        %v854 = vlaneseq
        %v855 = vshrl.u32 %v854, 7
        %v856 = vsub.s32 3, %v855
        %v857 = vrot.slane %v797, %v856
        %v858 = vmul.f32 %v848, %v853
        %v859 = vmul.f32 %v848, %v857
        %v860 = vadd.f32 %v844, %v858
        %v861 = vadd.f32 %v845, %v859
        %862 = vrot.lane.b32.xlu0 %v235, 112
        %v863 = vpop.permute.xlu0 %862
        %864 = vrot.lane.b32.xlu0 %v238, 112
        %v865 = vpop.permute.xlu0 %864
        %vm866 = vcmp.lt.s32.totalorder %v245, 112
        %v867 = vsel %vm866, %v863, %v865
        %v868 = vsel %vm866, %v865, %v863
        %s869 = scalar_lea.vmem [#allocation5], 7
        %v870 = vld [vmem:[%s869] ss:$8 sm:$0x3]
        %v872 = vlaneseq
        %v873 = vshrl.u32 %v872, 7
        %v874 = vsub.s32 0, %v873
        %v875 = vrot.slane %v870, %v874
        %v876 = vlaneseq
        %v877 = vshrl.u32 %v876, 7
        %v878 = vsub.s32 1, %v877
        %v879 = vrot.slane %v870, %v878
        %v882 = vmul.f32 %v867, %v875
        %v883 = vmul.f32 %v868, %v879
        %884 = vset.pattern.permute.xlu0 7
        %885 = vperm.xlu0 %884, %v236
        %v886 = vpop.permute.xlu0 %885
        %v888 = vlaneseq
        %v889 = vshrl.u32 %v888, 7
        %v890 = vsub.s32 0, %v889
        %v891 = vrot.slane %v882, %v890
        %v892 = vlaneseq
        %v893 = vshrl.u32 %v892, 7
        %v894 = vsub.s32 0, %v893
        %v895 = vrot.slane %v883, %v894
        %v896 = vmul.f32 %v886, %v891
        %v897 = vmul.f32 %v886, %v895
        %v898 = vadd.f32 %v860, %v896
        %v899 = vadd.f32 %v861, %v897
        %900 = vset.pattern.permute.xlu0 16
        %901 = vperm.xlu0 %900, %v236
        %v902 = vpop.permute.xlu0 %901
        %v904 = vlaneseq
        %v905 = vshrl.u32 %v904, 7
        %v906 = vsub.s32 1, %v905
        %v907 = vrot.slane %v882, %v906
        %v908 = vlaneseq
        %v909 = vshrl.u32 %v908, 7
        %v910 = vsub.s32 1, %v909
        %v911 = vrot.slane %v883, %v910
        %v912 = vmul.f32 %v902, %v907
        %v913 = vmul.f32 %v902, %v911
        %v914 = vadd.f32 %v898, %v912
        %v915 = vadd.f32 %v899, %v913
        %916 = vset.pattern.permute.xlu0 25
        %917 = vperm.xlu0 %916, %v236
        %v918 = vpop.permute.xlu0 %917
        %v920 = vlaneseq
        %v921 = vshrl.u32 %v920, 7
        %v922 = vsub.s32 2, %v921
        %v923 = vrot.slane %v882, %v922
        %v924 = vlaneseq
        %v925 = vshrl.u32 %v924, 7
        %v926 = vsub.s32 2, %v925
        %v927 = vrot.slane %v883, %v926
        %v928 = vmul.f32 %v918, %v923
        %v929 = vmul.f32 %v918, %v927
        %v930 = vadd.f32 %v914, %v928
        %v931 = vadd.f32 %v915, %v929
        %932 = vset.pattern.permute.xlu0 34
        %933 = vperm.xlu0 %932, %v236
        %v934 = vpop.permute.xlu0 %933
        %v936 = vlaneseq
        %v937 = vshrl.u32 %v936, 7
        %v938 = vsub.s32 3, %v937
        %v939 = vrot.slane %v882, %v938
        %v940 = vlaneseq
        %v941 = vshrl.u32 %v940, 7
        %v942 = vsub.s32 3, %v941
        %v943 = vrot.slane %v883, %v942
        %v944 = vmul.f32 %v934, %v939
        %v945 = vmul.f32 %v934, %v943
        %v946 = vadd.f32 %v930, %v944
        %v947 = vadd.f32 %v931, %v945
        %948 = vrot.lane.b32.xlu0 %v235, 111
        %v949 = vpop.permute.xlu0 %948
        %950 = vrot.lane.b32.xlu0 %v238, 111
        %v951 = vpop.permute.xlu0 %950
        %vm952 = vcmp.lt.s32.totalorder %v245, 111
        %v953 = vsel %vm952, %v949, %v951
        %v954 = vsel %vm952, %v951, %v949
        %s955 = scalar_lea.vmem [#allocation5], 16
        %v956 = vld [vmem:[%s955] ss:$8 sm:$0x3]
        %v958 = vlaneseq
        %v959 = vshrl.u32 %v958, 7
        %v960 = vsub.s32 0, %v959
        %v961 = vrot.slane %v956, %v960
        %v962 = vlaneseq
        %v963 = vshrl.u32 %v962, 7
        %v964 = vsub.s32 1, %v963
        %v965 = vrot.slane %v956, %v964
        %v968 = vmul.f32 %v953, %v961
        %v969 = vmul.f32 %v954, %v965
        %970 = vset.pattern.permute.xlu0 8
        %971 = vperm.xlu0 %970, %v236
        %v972 = vpop.permute.xlu0 %971
        %v974 = vlaneseq
        %v975 = vshrl.u32 %v974, 7
        %v976 = vsub.s32 0, %v975
        %v977 = vrot.slane %v968, %v976
        %v978 = vlaneseq
        %v979 = vshrl.u32 %v978, 7
        %v980 = vsub.s32 0, %v979
        %v981 = vrot.slane %v969, %v980
        %v982 = vmul.f32 %v972, %v977
        %v983 = vmul.f32 %v972, %v981
        %v984 = vadd.f32 %v946, %v982
        %v985 = vadd.f32 %v947, %v983
        %986 = vset.pattern.permute.xlu0 17
        %987 = vperm.xlu0 %986, %v236
        %v988 = vpop.permute.xlu0 %987
        %v990 = vlaneseq
        %v991 = vshrl.u32 %v990, 7
        %v992 = vsub.s32 1, %v991
        %v993 = vrot.slane %v968, %v992
        %v994 = vlaneseq
        %v995 = vshrl.u32 %v994, 7
        %v996 = vsub.s32 1, %v995
        %v997 = vrot.slane %v969, %v996
        %v998 = vmul.f32 %v988, %v993
        %v999 = vmul.f32 %v988, %v997
        %v1000 = vadd.f32 %v984, %v998
        %v1001 = vadd.f32 %v985, %v999
        %1002 = vset.pattern.permute.xlu0 26
        %1003 = vperm.xlu0 %1002, %v236
        %v1004 = vpop.permute.xlu0 %1003
        %v1006 = vlaneseq
        %v1007 = vshrl.u32 %v1006, 7
        %v1008 = vsub.s32 2, %v1007
        %v1009 = vrot.slane %v968, %v1008
        %v1010 = vlaneseq
        %v1011 = vshrl.u32 %v1010, 7
        %v1012 = vsub.s32 2, %v1011
        %v1013 = vrot.slane %v969, %v1012
        %v1014 = vmul.f32 %v1004, %v1009
        %v1015 = vmul.f32 %v1004, %v1013
        %v1016 = vadd.f32 %v1000, %v1014
        %v1017 = vadd.f32 %v1001, %v1015
        %1018 = vset.pattern.permute.xlu0 35
        %1019 = vperm.xlu0 %1018, %v236
        %v1020 = vpop.permute.xlu0 %1019
        %v1022 = vlaneseq
        %v1023 = vshrl.u32 %v1022, 7
        %v1024 = vsub.s32 3, %v1023
        %v1025 = vrot.slane %v968, %v1024
        %v1026 = vlaneseq
        %v1027 = vshrl.u32 %v1026, 7
        %v1028 = vsub.s32 3, %v1027
        %v1029 = vrot.slane %v969, %v1028
        %v1030 = vmul.f32 %v1020, %v1025
        %v1031 = vmul.f32 %v1020, %v1029
        %v1032 = vadd.f32 %v1016, %v1030
        %v1033 = vadd.f32 %v1017, %v1031
        %v1034 = vld [vmem:[%s2] sm:$0xf]
        %1036 = vset.pattern.permute.xlu0 0
        %1037 = vperm.xlu0 %1036, %v1034
        %v1038 = vpop.permute.xlu0 %1037
        %v1040 = vadd.f32 %v1032, %v1038
        %v1041 = vadd.f32 %v1033, %v1038
        %v1044 = vrot.slane %v1040, 4
        %v1045 = vrot.slane %v1041, 4
        %1048 = vst [vmem:[%s228] sm:$0xf0] %v1044
        %1049 = vst [vmem:[%s228 + $0x8] sm:$0xf0] %v1045
        %s1050 = sand.u32 %s119, 1
        %s1051 = scalar_lea.sflag [#allocation4], %s1050
        %s1052 = sand.u32 %s119, 1
        %s1053 = smul.addr %s1052, 16
        %s1054 = scalar_lea.vmem [#allocation7], %s1053
        // Predicated region
        $region45: #{tpu_custom_call.1} parent=35 // pred_check
          %p1055 = pneg %p129
        $region46: #{tpu_custom_call.1} parent=35 // pred_check_branch
          %1057 = sbr.rel (%p1055) target = $region48
        $region47: #{tpu_custom_call.1} parent=35 // pred_region
          %s1059 = ssub.s32 256, 256
          %1060 = vsyncadd %s1051, %s1059
          %s1061 = smul.addr %s22, 2
          %s1062 = smul.addr %s1061, 128
          %s1063 = scalar_lea.hbm %s4, %s1062
          %s1065 = sshll.u32 %s1054, 4
          %s1066 = int_to_ptr.vmem [resolvable:$true] %s1065
          %1068 = dma.vmem_to_hbm [thread:$0]  %s1066, 256, %s1063, %s1051
        $region48: #{tpu_custom_call.1} parent=35 // pred_fallthru
          _
      $region36: #{tpu_custom_call.1} parent=5 // pred_fallthru
        _
      %p1069 = scmp.le.s32.totalorder 2, %s17
      // Predicated region
      $region49: #{tpu_custom_call.1} parent=5 // pred_check
        %p1070 = pneg %p1069
      $region50: #{tpu_custom_call.1} parent=5 // pred_check_branch
        %1072 = sbr.rel (%p1070) target = $region52
      $region51: #{tpu_custom_call.1} parent=5 // pred_region
        %s1073 = ssub.s32 %s17, 2
        // Predicated region
        $region53: #{tpu_custom_call.1} parent=51 // pred_check
          %p1074 = pneg %p135
        $region54: #{tpu_custom_call.1} parent=51 // pred_check_branch
          %1076 = sbr.rel (%p1074) target = $region56
        $region55: #{tpu_custom_call.1} parent=51 // pred_region
          %s1077 = sand.u32 %s120, 1
          %s1078 = scalar_lea.sflag [#allocation4], %s1077
          %s1079 = sand.u32 %s120, 1
          %s1080 = smul.addr %s1079, 16
          %s1081 = scalar_lea.vmem [#allocation7], %s1080
          %1082 = dma.done %s1078, 256
        $region56: #{tpu_custom_call.1} parent=51 // pred_fallthru
          _
      $region52: #{tpu_custom_call.1} parent=5 // pred_fallthru
        _
    $region6: #{tpu_custom_call.1} parent=1 // loop_footer
      %s21 = sadd.s32 1, %s17
    $region7: #{tpu_custom_call.1} parent=1 // loop_footer_branch
      %16 = sbr.rel target = $region3
    $region8: #{tpu_custom_call.1} parent=1 // loop_exit
      _
    %1083 = vsyncpa [#allocation3], 1
    %s1084 = scalar_lea.sflag [#allocation3], 1
    %1085 = vsyncpa %s1084, 1
    %1086 = vsyncpa [#allocation6], 1
    %1087 = vsyncpa [#allocation4], 1
    %s1088 = scalar_lea.sflag [#allocation4], 1
    %1089 = vsyncpa %s1088, 1

</llo_original>
